<compile_context>
chip_gen: v7x
topology: tpu7x:2x2x1
jax: 0.10.0
libtpu: 0.0.40
codegen_flags: <defaults>
</compile_context>

<pallas_src>
import math
import functools

import jax
import jax.numpy as jnp
from jax.experimental import pallas as pl
from jax.experimental.pallas import tpu as pltpu


def _rbf_kernel(dist_ref, means_ref, betas_ref, out_ref, *, rbound_upper):
    # dist_ref:  (rows_tile, P)          f32  (P edges packed per row)
    # means_ref: (1, P*num_rbf)          f32  (means tiled P times: lane c -> means[c % num_rbf])
    # betas_ref: (1, P*num_rbf)          f32
    # out_ref:   (rows_tile, P*num_rbf)  row-major == (rows_tile*P, num_rbf)
    d = dist_ref[...]                                   # (rows, P)
    rows, p = d.shape
    width = out_ref.shape[-1]
    nrbf = width // p

    # Expand d to the lane-dense output layout: d_x[r, c] = d[r, c // nrbf].
    # Single-lane broadcasts + select fold -> VPU/XLU only, MXU stays idle,
    # and the expansion is exact (no rounding, no NaN cross-contamination).
    d_x = jnp.broadcast_to(d[:, 0:1], (rows, width))
    if p > 1:
        lane = jax.lax.broadcasted_iota(jnp.int32, (1, width), 1)
        for i in range(1, p):
            d_x = jnp.where(lane >= i * nrbf,
                            jnp.broadcast_to(d[:, i:i + 1], (rows, width)),
                            d_x)

    means = means_ref[...]                              # (1, width)
    betas = betas_ref[...]                              # (1, width)

    # Full-lane-occupancy transcendentals (EUP) + elementwise (VPU).
    rb = 0.5 * (jnp.cos(d_x * (math.pi / rbound_upper)) + 1.0)
    rb = rb * (d_x < rbound_upper).astype(jnp.float32)  # matches PyTorch (incl. NaN propagation)
    t = jnp.exp(-d_x)
    out = rb * jnp.exp(-betas * jnp.square(t - means))
    out_ref[...] = out.astype(out_ref.dtype)


def make_rbf_params(num_rbf: int, rbound_upper: float):
    """Deterministic buffer init, mirroring RBFEmb._initial_params."""
    start_value = math.exp(-rbound_upper)
    end_value = math.exp(-0.0)  # rbound_lower == 0
    means = jnp.linspace(start_value, end_value, num_rbf, dtype=jnp.float32)
    beta_val = (2.0 / num_rbf * (end_value - start_value)) ** (-2)
    betas = jnp.full((num_rbf,), beta_val, dtype=jnp.float32)
    return means, betas


def rbf_emb(dist, means, betas, rbound_upper: float, *,
            tile_e: int = 65536, out_dtype=jnp.float32):
    """dist: any shape; returns dist.shape + (num_rbf,) in out_dtype (default f32)."""
    orig_shape = dist.shape
    num_rbf = int(means.shape[0])

    # Pack P edges per row so the packed row width P*num_rbf is a multiple of
    # 128 lanes and (rows, P*num_rbf) is exactly the row-major layout of
    # (E, num_rbf) (the final reshape is contiguous / free).
    P = 128 // math.gcd(num_rbf, 128)
    width = P * num_rbf

    dist_flat = dist.reshape(-1).astype(jnp.float32)
    e = dist_flat.shape[0]
    if e == 0:
        return jnp.zeros((*orig_shape, num_rbf), out_dtype)

    e_pad = ((e + P - 1) // P) * P
    if e_pad != e:
        # Rare ragged tail (E not a multiple of P): pad with 0 + slice fallback.
        dist_flat = jnp.pad(dist_flat, (0, e_pad - e))
    rows = e_pad // P
    dist2d = dist_flat.reshape(rows, P)

    means_w = jnp.tile(means.astype(jnp.float32), P).reshape(1, width)
    betas_w = jnp.tile(betas.astype(jnp.float32), P).reshape(1, width)

    # Row-tile selection:
    #  * large problems: ~tile_e edges per grid step (multiple of 8 rows),
    #  * small/medium problems: aim for >=2-4 blocks so v7x's two TensorCores
    #    both get work via the "parallel" grid axis,
    #  * tiny problems (rows <= 8): single full block (full-dim block is legal).
    max_tile_rows = max(8, (tile_e // P // 8) * 8)
    if rows <= 8:
        tile_rows = rows
    else:
        target = ((pl.cdiv(rows, 4) + 7) // 8) * 8   # ~4 blocks, multiple of 8
        tile_rows = max(8, min(max_tile_rows, target))
    n_blocks = pl.cdiv(rows, tile_rows)

    out_bytes = jnp.dtype(out_dtype).itemsize
    cost = pl.CostEstimate(
        flops=int(10 * e_pad * num_rbf),
        transcendentals=int(3 * e_pad * num_rbf),
        bytes_accessed=int(4 * e_pad + out_bytes * e_pad * num_rbf + 8 * width),
    )

    kernel = functools.partial(_rbf_kernel, rbound_upper=float(rbound_upper))

    out = pl.pallas_call(
        kernel,
        out_shape=jax.ShapeDtypeStruct((rows, width), out_dtype),
        grid_spec=pltpu.PrefetchScalarGridSpec(
            num_scalar_prefetch=0,
            grid=(n_blocks,),
            in_specs=[
                pl.BlockSpec((tile_rows, P), lambda i: (i, 0)),
                pl.BlockSpec((1, width), lambda i: (0, 0)),
                pl.BlockSpec((1, width), lambda i: (0, 0)),
            ],
            out_specs=pl.BlockSpec((tile_rows, width), lambda i: (i, 0)),
        ),
        compiler_params=pltpu.CompilerParams(
            dimension_semantics=("parallel",),
            vmem_limit_bytes=48 * 1024 * 1024),
        cost_estimate=cost,
    )(dist2d, means_w, betas_w)

    out = out.reshape(e_pad, num_rbf)      # contiguous reshape, no data movement
    if e_pad != e:
        out = out[:e]
    return out.reshape(*orig_shape, num_rbf)


def rbf_emb_ref(dist, means, betas, rbound_upper: float):
    """Pure-JAX reference mirroring the PyTorch forward."""
    d = dist[..., None].astype(jnp.float32)
    rbounds = 0.5 * (jnp.cos(d * math.pi / rbound_upper) + 1.0)
    rbounds = rbounds * (d < rbound_upper).astype(jnp.float32)
    return rbounds * jnp.exp(-betas * jnp.square(jnp.exp(-d) - means))


if __name__ == "__main__":
    num_rbf = 16
    rbound_upper = 5.0
    means, betas = make_rbf_params(num_rbf, rbound_upper)

    key = jax.random.PRNGKey(0)
    k1, k2 = jax.random.split(key)

    # Case 1: pairwise distances for a small graph, shape (batch=2, n=8, n=8).
    dist = jax.random.uniform(k1, (2, 8, 8), dtype=jnp.float32,
                              minval=0.0, maxval=rbound_upper * 1.2)
    out = jax.block_until_ready(rbf_emb(dist, means, betas, rbound_upper))
    ref = rbf_emb_ref(dist, means, betas, rbound_upper)
    assert out.shape == (2, 8, 8, num_rbf), out.shape
    assert jnp.allclose(out, ref, atol=1e-5, rtol=1e-5), \
        float(jnp.max(jnp.abs(out - ref)))

    # Case 2: ragged edge count (E % P != 0) exercises the pad/slice tail path.
    dist_tail = jax.random.uniform(k2, (50,), dtype=jnp.float32,
                                   minval=0.0, maxval=rbound_upper * 1.2)
    out_t = jax.block_until_ready(rbf_emb(dist_tail, means, betas, rbound_upper))
    ref_t = rbf_emb_ref(dist_tail, means, betas, rbound_upper)
    assert out_t.shape == (50, num_rbf), out_t.shape
    assert jnp.allclose(out_t, ref_t, atol=1e-5, rtol=1e-5), \
        float(jnp.max(jnp.abs(out_t - ref_t)))

    print("KERNEL_OK")
</pallas_src>

<mosaic_0001>
module attributes {stable_mosaic.version = 11 : i64} {
  func.func @_rbf_kernel(%arg0: i32, %arg1: memref<8x8xf32, #tpu.memory_space<vmem>>, %arg2: memref<1x128xf32, #tpu.memory_space<vmem>>, %arg3: memref<1x128xf32, #tpu.memory_space<vmem>>, %arg4: memref<8x128xf32, #tpu.memory_space<vmem>>) attributes {dimension_semantics = [#tpu.dimension_semantics<parallel>], iteration_bounds = array<i64: 2>, scalar_prefetch = 0 : i64, scratch_operands = 0 : i64, tpu.core_type = #tpu.core_type<tc>, window_params = [{transform_indices = @transform_0, window_bounds = array<i64: 8, 8>}, {pipeline_mode = #tpu.pipeline_mode<synchronous>, transform_indices = @transform_1, window_bounds = array<i64: 1, 128>}, {pipeline_mode = #tpu.pipeline_mode<synchronous>, transform_indices = @transform_2, window_bounds = array<i64: 1, 128>}, {transform_indices = @transform_3, window_bounds = array<i64: 8, 128>}]} {
    %c0 = arith.constant 0 : index
    %c0_0 = arith.constant 0 : index
    %0 = vector.load %arg1[%c0, %c0_0] : memref<8x8xf32, #tpu.memory_space<vmem>>, vector<8x8xf32>
    %1 = vector.extract_strided_slice %0 {offsets = [0, 0], sizes = [8, 1], strides = [1, 1]} : vector<8x8xf32> to vector<8x1xf32>
    %2 = vector.shape_cast %1 : vector<8x1xf32> to vector<8x1xf32>
    %3 = vector.broadcast %2 : vector<8x1xf32> to vector<8x128xf32>
    %4 = tpu.iota {dimensions = array<i32: 1>} : vector<1x128xi32>
    %c16_i32 = arith.constant 16 : i32
    %5 = vector.broadcast %c16_i32 : i32 to vector<1x128xi32>
    %6 = arith.cmpi sge, %4, %5 : vector<1x128xi32>
    %7 = vector.extract_strided_slice %0 {offsets = [0, 1], sizes = [8, 1], strides = [1, 1]} : vector<8x8xf32> to vector<8x1xf32>
    %8 = vector.shape_cast %7 : vector<8x1xf32> to vector<8x1xf32>
    %9 = vector.broadcast %8 : vector<8x1xf32> to vector<8x128xf32>
    %10 = vector.shape_cast %6 : vector<1x128xi1> to vector<1x128xi1>
    %11 = vector.broadcast %10 : vector<1x128xi1> to vector<8x128xi1>
    %12 = arith.select %11, %9, %3 : vector<8x128xi1>, vector<8x128xf32>
    %c32_i32 = arith.constant 32 : i32
    %13 = vector.broadcast %c32_i32 : i32 to vector<1x128xi32>
    %14 = arith.cmpi sge, %4, %13 : vector<1x128xi32>
    %15 = vector.extract_strided_slice %0 {offsets = [0, 2], sizes = [8, 1], strides = [1, 1]} : vector<8x8xf32> to vector<8x1xf32>
    %16 = vector.shape_cast %15 : vector<8x1xf32> to vector<8x1xf32>
    %17 = vector.broadcast %16 : vector<8x1xf32> to vector<8x128xf32>
    %18 = vector.shape_cast %14 : vector<1x128xi1> to vector<1x128xi1>
    %19 = vector.broadcast %18 : vector<1x128xi1> to vector<8x128xi1>
    %20 = arith.select %19, %17, %12 : vector<8x128xi1>, vector<8x128xf32>
    %c48_i32 = arith.constant 48 : i32
    %21 = vector.broadcast %c48_i32 : i32 to vector<1x128xi32>
    %22 = arith.cmpi sge, %4, %21 : vector<1x128xi32>
    %23 = vector.extract_strided_slice %0 {offsets = [0, 3], sizes = [8, 1], strides = [1, 1]} : vector<8x8xf32> to vector<8x1xf32>
    %24 = vector.shape_cast %23 : vector<8x1xf32> to vector<8x1xf32>
    %25 = vector.broadcast %24 : vector<8x1xf32> to vector<8x128xf32>
    %26 = vector.shape_cast %22 : vector<1x128xi1> to vector<1x128xi1>
    %27 = vector.broadcast %26 : vector<1x128xi1> to vector<8x128xi1>
    %28 = arith.select %27, %25, %20 : vector<8x128xi1>, vector<8x128xf32>
    %c64_i32 = arith.constant 64 : i32
    %29 = vector.broadcast %c64_i32 : i32 to vector<1x128xi32>
    %30 = arith.cmpi sge, %4, %29 : vector<1x128xi32>
    %31 = vector.extract_strided_slice %0 {offsets = [0, 4], sizes = [8, 1], strides = [1, 1]} : vector<8x8xf32> to vector<8x1xf32>
    %32 = vector.shape_cast %31 : vector<8x1xf32> to vector<8x1xf32>
    %33 = vector.broadcast %32 : vector<8x1xf32> to vector<8x128xf32>
    %34 = vector.shape_cast %30 : vector<1x128xi1> to vector<1x128xi1>
    %35 = vector.broadcast %34 : vector<1x128xi1> to vector<8x128xi1>
    %36 = arith.select %35, %33, %28 : vector<8x128xi1>, vector<8x128xf32>
    %c80_i32 = arith.constant 80 : i32
    %37 = vector.broadcast %c80_i32 : i32 to vector<1x128xi32>
    %38 = arith.cmpi sge, %4, %37 : vector<1x128xi32>
    %39 = vector.extract_strided_slice %0 {offsets = [0, 5], sizes = [8, 1], strides = [1, 1]} : vector<8x8xf32> to vector<8x1xf32>
    %40 = vector.shape_cast %39 : vector<8x1xf32> to vector<8x1xf32>
    %41 = vector.broadcast %40 : vector<8x1xf32> to vector<8x128xf32>
    %42 = vector.shape_cast %38 : vector<1x128xi1> to vector<1x128xi1>
    %43 = vector.broadcast %42 : vector<1x128xi1> to vector<8x128xi1>
    %44 = arith.select %43, %41, %36 : vector<8x128xi1>, vector<8x128xf32>
    %c96_i32 = arith.constant 96 : i32
    %45 = vector.broadcast %c96_i32 : i32 to vector<1x128xi32>
    %46 = arith.cmpi sge, %4, %45 : vector<1x128xi32>
    %47 = vector.extract_strided_slice %0 {offsets = [0, 6], sizes = [8, 1], strides = [1, 1]} : vector<8x8xf32> to vector<8x1xf32>
    %48 = vector.shape_cast %47 : vector<8x1xf32> to vector<8x1xf32>
    %49 = vector.broadcast %48 : vector<8x1xf32> to vector<8x128xf32>
    %50 = vector.shape_cast %46 : vector<1x128xi1> to vector<1x128xi1>
    %51 = vector.broadcast %50 : vector<1x128xi1> to vector<8x128xi1>
    %52 = arith.select %51, %49, %44 : vector<8x128xi1>, vector<8x128xf32>
    %c112_i32 = arith.constant 112 : i32
    %53 = vector.broadcast %c112_i32 : i32 to vector<1x128xi32>
    %54 = arith.cmpi sge, %4, %53 : vector<1x128xi32>
    %55 = vector.extract_strided_slice %0 {offsets = [0, 7], sizes = [8, 1], strides = [1, 1]} : vector<8x8xf32> to vector<8x1xf32>
    %56 = vector.shape_cast %55 : vector<8x1xf32> to vector<8x1xf32>
    %57 = vector.broadcast %56 : vector<8x1xf32> to vector<8x128xf32>
    %58 = vector.shape_cast %54 : vector<1x128xi1> to vector<1x128xi1>
    %59 = vector.broadcast %58 : vector<1x128xi1> to vector<8x128xi1>
    %60 = arith.select %59, %57, %52 : vector<8x128xi1>, vector<8x128xf32>
    %c0_1 = arith.constant 0 : index
    %c0_2 = arith.constant 0 : index
    %61 = vector.load %arg2[%c0_1, %c0_2] : memref<1x128xf32, #tpu.memory_space<vmem>>, vector<1x128xf32>
    %c0_3 = arith.constant 0 : index
    %c0_4 = arith.constant 0 : index
    %62 = vector.load %arg3[%c0_3, %c0_4] : memref<1x128xf32, #tpu.memory_space<vmem>>, vector<1x128xf32>
    %cst = arith.constant 0.628318548 : f32
    %63 = vector.broadcast %cst : f32 to vector<8x128xf32>
    %64 = arith.mulf %60, %63 : vector<8x128xf32>
    %65 = math.cos %64 : vector<8x128xf32>
    %cst_5 = arith.constant 1.000000e+00 : f32
    %66 = vector.broadcast %cst_5 : f32 to vector<8x128xf32>
    %67 = arith.addf %65, %66 : vector<8x128xf32>
    %cst_6 = arith.constant 5.000000e-01 : f32
    %68 = vector.broadcast %cst_6 : f32 to vector<8x128xf32>
    %69 = arith.mulf %68, %67 : vector<8x128xf32>
    %cst_7 = arith.constant 5.000000e+00 : f32
    %70 = vector.broadcast %cst_7 : f32 to vector<8x128xf32>
    %71 = arith.cmpf olt, %60, %70 : vector<8x128xf32>
    %72 = arith.extui %71 : vector<8x128xi1> to vector<8x128xi32>
    %73 = arith.sitofp %72 : vector<8x128xi32> to vector<8x128xf32>
    %74 = arith.mulf %69, %73 : vector<8x128xf32>
    %cst_8 = arith.constant 0.000000e+00 : f32
    %75 = vector.broadcast %cst_8 : f32 to vector<8x128xf32>
    %76 = arith.subf %75, %60 : vector<8x128xf32>
    %77 = math.exp %76 : vector<8x128xf32>
    %cst_9 = arith.constant 0.000000e+00 : f32
    %78 = vector.broadcast %cst_9 : f32 to vector<1x128xf32>
    %79 = arith.subf %78, %62 : vector<1x128xf32>
    %80 = vector.broadcast %61 : vector<1x128xf32> to vector<8x128xf32>
    %81 = arith.subf %77, %80 : vector<8x128xf32>
    %82 = arith.mulf %81, %81 : vector<8x128xf32>
    %83 = vector.broadcast %79 : vector<1x128xf32> to vector<8x128xf32>
    %84 = arith.mulf %83, %82 : vector<8x128xf32>
    %85 = math.exp %84 : vector<8x128xf32>
    %86 = arith.mulf %74, %85 : vector<8x128xf32>
    %c0_10 = arith.constant 0 : index
    %c0_11 = arith.constant 0 : index
    %87 = vector.load %arg4[%c0_10, %c0_11] : memref<8x128xf32, #tpu.memory_space<vmem>>, vector<8x128xf32>
    tpu.vector_store %arg4[%c0_10, %c0_11], %86 {strides = array<i32>} : memref<8x128xf32, #tpu.memory_space<vmem>>, vector<8x128xf32>,
    return
  }
  func.func @transform_0(%arg0: i32) -> (i32, i32) {
    %c0_i32 = arith.constant 0 : i32
    %c0_i32_0 = arith.constant 0 : i32
    return %arg0, %c0_i32 : i32, i32
  }
  func.func @transform_1(%arg0: i32) -> (i32, i32) {
    %c0_i32 = arith.constant 0 : i32
    %c0_i32_0 = arith.constant 0 : i32
    %c0_i32_1 = arith.constant 0 : i32
    return %c0_i32, %c0_i32_0 : i32, i32
  }
  func.func @transform_2(%arg0: i32) -> (i32, i32) {
    %c0_i32 = arith.constant 0 : i32
    %c0_i32_0 = arith.constant 0 : i32
    %c0_i32_1 = arith.constant 0 : i32
    return %c0_i32, %c0_i32_0 : i32, i32
  }
  func.func @transform_3(%arg0: i32) -> (i32, i32) {
    %c0_i32 = arith.constant 0 : i32
    %c0_i32_0 = arith.constant 0 : i32
    return %arg0, %c0_i32 : i32, i32
  }
}

</mosaic_0001>

<llo_original>
// kernel: tpu_custom_call.1
$region0: #{tpu_custom_call.1}
  #allocation0 [shape = 'u32[]', space=smem, size = 0x4, offset = 0x4, fixed_abs, tag = 'smem constant byte address 0x4 - core index']
  #allocation1 [shape = 'u32[144,128]{1,0:T(1,128)}', space=vmem, size = 0x12000, scoped, tag = 'internal scratch']
  %s0 = inlined_call_operand.vmem [shape: f32[16,8], index: 0, kind: input, shape index: {}]
  %s1 = inlined_call_operand.vmem [shape: f32[1,128], index: 1, kind: input, shape index: {}]
  %s2 = inlined_call_operand.vmem [shape: f32[1,128], index: 2, kind: input, shape index: {}]
  %s3 = inlined_call_operand.hbm [shape: f32[16,128], index: 3, kind: output, shape index: {}]
  %s4 = sld [smem:[#allocation0]]
  $region45: #{tpu_custom_call.1} parent=0
    _
  %s6 = ssub.s32 1, %s4
  %s7 = scalar_select 0, %s6, %s4
  $region1: #{tpu_custom_call.1} parent=0
    #allocation2 [shape = 'u8[8192]{0}', space=vmem, size = 0x2000, scoped, tag = 'output window, operand 0']
    #allocation3 [shape = 's32[2]{0}', space=sflag, size = 0x8, scoped, tag = 'scoped memory for tpu_custom_call.1']
    %8 = vsyncpa [#allocation3], 0
    %s9 = scalar_lea.sflag [#allocation3], 1
    %10 = vsyncpa %s9, 0
    loop: start=0, step=1, limit=4
    $region2: #{tpu_custom_call.1} parent=1 // loop_pre_header
      _
    $region3: #{tpu_custom_call.1} parent=1 // loop_header
      %s12 = sphi 0, %s16
      %p13 = scmp.ge.s32.totalorder %s12, 4
      %s22 = sphi 0, %s24
      %s25 = sphi 0, %s22
      %s26 = sphi 0, %s25
      %s42 = sphi 0, %s26
      %s46 = sphi 0, %s46
      %s48 = sphi 0, %s46
      %s49 = sphi 0, %s48
      %s63 = sphi 0, %s49
      %s67 = sphi 0, %s67
      %s69 = sphi 0, %s67
      %s70 = sphi 0, %s69
      %s84 = sphi 0, %s70
      %s90 = sphi 0, %s92
      %s93 = sphi 0, %s90
      %s94 = sphi 0, %s93
      %s110 = sphi 0, %s94
    $region4: #{tpu_custom_call.1} parent=1 // loop_header_branch
      %15 = sbr.rel (%p13) target = $region8
    $region5: #{tpu_custom_call.1} parent=1 // loop_body
      %s17 = ssub.s32 %s12, 1
      %s18 = ssub.s32 %s12, 2
      %s19 = sadd.s32 %s12, 1
      %s20 = ssub.s32 %s12, %s19
      %p21 = scmp.eq.s32.totalorder %s20, 0
      %s23 = sadd.s32 %s22, 1
      %s24 = scalar_select %p21, %s22, %s23
      %p27 = pneg %p21
      %p28 = scmp.eq.s32.totalorder %s12, 1
      %p29 = por %p27, %p28
      %p30 = scmp.ne.s32.totalorder %s22, %s25
      %p31 = scmp.eq.s32.totalorder %s12, 0
      %p32 = por %p30, %p31
      %p33 = scmp.ne.s32.totalorder %s22, %s25
      %p34 = scmp.eq.s32.totalorder %s17, 1
      %p35 = por %p33, %p34
      %p36 = scmp.ne.s32.totalorder %s25, %s26
      %p37 = scmp.eq.s32.totalorder %s17, 0
      %p38 = por %p36, %p37
      %p39 = scmp.ne.s32.totalorder %s25, %s26
      %p40 = scmp.eq.s32.totalorder %s18, 1
      %p41 = por %p39, %p40
      %p43 = scmp.ne.s32.totalorder %s26, %s42
      %p44 = scmp.eq.s32.totalorder %s18, 0
      %p45 = por %p43, %p44
      %s47 = sadd.s32 %s46, 1
      %p50 = scmp.eq.s32.totalorder %s12, 1
      %p51 = scmp.ne.s32.totalorder %s46, %s48
      %p52 = scmp.eq.s32.totalorder %s12, 0
      %p53 = por %p51, %p52
      %p54 = scmp.ne.s32.totalorder %s46, %s48
      %p55 = scmp.eq.s32.totalorder %s17, 1
      %p56 = por %p54, %p55
      %p57 = scmp.ne.s32.totalorder %s48, %s49
      %p58 = scmp.eq.s32.totalorder %s17, 0
      %p59 = por %p57, %p58
      %p60 = scmp.ne.s32.totalorder %s48, %s49
      %p61 = scmp.eq.s32.totalorder %s18, 1
      %p62 = por %p60, %p61
      %p64 = scmp.ne.s32.totalorder %s49, %s63
      %p65 = scmp.eq.s32.totalorder %s18, 0
      %p66 = por %p64, %p65
      %s68 = sadd.s32 %s67, 1
      %p71 = scmp.eq.s32.totalorder %s12, 1
      %p72 = scmp.ne.s32.totalorder %s67, %s69
      %p73 = scmp.eq.s32.totalorder %s12, 0
      %p74 = por %p72, %p73
      %p75 = scmp.ne.s32.totalorder %s67, %s69
      %p76 = scmp.eq.s32.totalorder %s17, 1
      %p77 = por %p75, %p76
      %p78 = scmp.ne.s32.totalorder %s69, %s70
      %p79 = scmp.eq.s32.totalorder %s17, 0
      %p80 = por %p78, %p79
      %p81 = scmp.ne.s32.totalorder %s69, %s70
      %p82 = scmp.eq.s32.totalorder %s18, 1
      %p83 = por %p81, %p82
      %p85 = scmp.ne.s32.totalorder %s70, %s84
      %p86 = scmp.eq.s32.totalorder %s18, 0
      %p87 = por %p85, %p86
      %s88 = ssub.s32 %s12, %s19
      %p89 = scmp.eq.s32.totalorder %s88, 0
      %s91 = sadd.s32 %s90, 1
      %s92 = scalar_select %p89, %s90, %s91
      %p95 = pneg %p89
      %p96 = scmp.eq.s32.totalorder %s12, 1
      %p97 = por %p95, %p96
      %p98 = scmp.ne.s32.totalorder %s90, %s93
      %p99 = scmp.eq.s32.totalorder %s12, 0
      %p100 = por %p98, %p99
      %p101 = scmp.ne.s32.totalorder %s90, %s93
      %p102 = scmp.eq.s32.totalorder %s17, 1
      %p103 = por %p101, %p102
      %p104 = scmp.ne.s32.totalorder %s93, %s94
      %p105 = scmp.eq.s32.totalorder %s17, 0
      %p106 = por %p104, %p105
      %p107 = scmp.ne.s32.totalorder %s93, %s94
      %p108 = scmp.eq.s32.totalorder %s18, 1
      %p109 = por %p107, %p108
      %p111 = scmp.ne.s32.totalorder %s94, %s110
      %p112 = scmp.eq.s32.totalorder %s18, 0
      %p113 = por %p111, %p112
      %p114 = scmp.le.s32.totalorder 1, %s12
      %p115 = scmp.lt.s32.totalorder %s12, 3
      %p116 = pnand %p114, %p115
      %p117 = pneg %p116
      // Predicated region
      $region9: #{tpu_custom_call.1} parent=5 // pred_check
        _
      $region10: #{tpu_custom_call.1} parent=5 // pred_check_branch
        %119 = sbr.rel (%p116) target = $region12
      $region11: #{tpu_custom_call.1} parent=5 // pred_region
        %s120 = ssub.s32 %s12, 1
        // Predicated region
        $region13: #{tpu_custom_call.1} parent=11 // pred_check
          %p121 = pneg %p59
        $region14: #{tpu_custom_call.1} parent=11 // pred_check_branch
          %123 = sbr.rel (%p121) target = $region16
        $region15: #{tpu_custom_call.1} parent=11 // pred_region
          _
        $region16: #{tpu_custom_call.1} parent=11 // pred_fallthru
          _
        // Predicated region
        $region17: #{tpu_custom_call.1} parent=11 // pred_check
          %p124 = pneg %p80
        $region18: #{tpu_custom_call.1} parent=11 // pred_check_branch
          %126 = sbr.rel (%p124) target = $region20
        $region19: #{tpu_custom_call.1} parent=11 // pred_region
          _
        $region20: #{tpu_custom_call.1} parent=11 // pred_fallthru
          _
      $region12: #{tpu_custom_call.1} parent=5 // pred_fallthru
        _
      %p127 = scmp.lt.s32.totalorder %s12, 2
      // Predicated region
      $region21: #{tpu_custom_call.1} parent=5 // pred_check
        %p128 = pneg %p127
      $region22: #{tpu_custom_call.1} parent=5 // pred_check_branch
        %130 = sbr.rel (%p128) target = $region24
      $region23: #{tpu_custom_call.1} parent=5 // pred_region
        // Predicated region
        $region25: #{tpu_custom_call.1} parent=23 // pred_check
          %p131 = pneg %p32
        $region26: #{tpu_custom_call.1} parent=23 // pred_check_branch
          %133 = sbr.rel (%p131) target = $region28
        $region27: #{tpu_custom_call.1} parent=23 // pred_region
          %p134 = scmp.lt.s32.totalorder %s12, 1
          %s135 = scalar_select %p134, %s12, 1
          %s136 = smul.addr %s135, 8
          %s137 = scalar_lea.vmem %s0, %s136
        $region28: #{tpu_custom_call.1} parent=23 // pred_fallthru
          _
      $region24: #{tpu_custom_call.1} parent=5 // pred_fallthru
        _
      %p138 = scmp.le.s32.totalorder 1, %s12
      %p139 = scmp.lt.s32.totalorder %s12, 3
      %p140 = pnand %p138, %p139
      %p141 = pneg %p140
      // Predicated region
      $region29: #{tpu_custom_call.1} parent=5 // pred_check
        _
      $region30: #{tpu_custom_call.1} parent=5 // pred_check_branch
        %143 = sbr.rel (%p140) target = $region32
      $region31: #{tpu_custom_call.1} parent=5 // pred_region
        %s144 = ssub.s32 %s12, 1
        %p145 = scmp.lt.s32.totalorder %s17, 1
        %s146 = scalar_select %p145, %s17, 1
        %s147 = smul.addr %s146, 8
        %s148 = scalar_lea.vmem %s0, %s147
        %p149 = pneg %p38
        %p150 = pneg %p35
        %p151 = pneg %p59
        %p152 = pneg %p56
        %p153 = pneg %p80
        %p154 = pneg %p77
        %p155 = pneg %p106
        %p156 = pneg %p103
        %s157 = sand.u32 %s93, 1
        %s158 = scalar_lea.sflag [#allocation3], %s157
        %s159 = sand.u32 %s93, 1
        %s160 = smul.addr %s159, 8
        %s161 = scalar_lea.vmem [#allocation2], %s160
        %p162 = scmp.lt.s32.totalorder %s17, 1
        %s163 = scalar_select %p162, %s17, 1
        %s164 = smul.addr %s163, 8
        %s165 = scalar_lea.vmem %s0, %s164
        %v166 = vld [vmem:[%s165] sm:$0xff]
        %168 = vset.pattern.permute.xlu0 0
        %169 = vperm.xlu0 %168, %v166
        %v170 = vpop.permute.xlu0 %169
        %v172 = vlaneseq
        %v173 = vand.u32 %v172, 127
        %vm174 = vcmp.ge.s32.totalorder %v173, 16
        %175 = vset.pattern.permute.xlu0 1
        %176 = vperm.xlu0 %175, %v166
        %v177 = vpop.permute.xlu0 %176
        %v179 = vsel %vm174, 1, 0
        %vm180 = vcmp.eq.s32.totalorder %v179, 1
        %v181 = vsel %vm180, %v177, %v170
        %vm182 = vcmp.ge.s32.totalorder %v173, 32
        %183 = vset.pattern.permute.xlu0 2
        %184 = vperm.xlu0 %183, %v166
        %v185 = vpop.permute.xlu0 %184
        %v187 = vsel %vm182, 1, 0
        %vm188 = vcmp.eq.s32.totalorder %v187, 1
        %v189 = vsel %vm188, %v185, %v181
        %vm190 = vcmp.ge.s32.totalorder %v173, 48
        %191 = vset.pattern.permute.xlu0 3
        %192 = vperm.xlu0 %191, %v166
        %v193 = vpop.permute.xlu0 %192
        %v195 = vsel %vm190, 1, 0
        %vm196 = vcmp.eq.s32.totalorder %v195, 1
        %v197 = vsel %vm196, %v193, %v189
        %vm198 = vcmp.ge.s32.totalorder %v173, 64
        %199 = vset.pattern.permute.xlu0 4
        %200 = vperm.xlu0 %199, %v166
        %v201 = vpop.permute.xlu0 %200
        %v203 = vsel %vm198, 1, 0
        %vm204 = vcmp.eq.s32.totalorder %v203, 1
        %v205 = vsel %vm204, %v201, %v197
        %vm206 = vcmp.ge.s32.totalorder %v173, 80
        %207 = vset.pattern.permute.xlu0 5
        %208 = vperm.xlu0 %207, %v166
        %v209 = vpop.permute.xlu0 %208
        %v211 = vsel %vm206, 1, 0
        %vm212 = vcmp.eq.s32.totalorder %v211, 1
        %v213 = vsel %vm212, %v209, %v205
        %vm214 = vcmp.ge.s32.totalorder %v173, 96
        %215 = vset.pattern.permute.xlu0 6
        %216 = vperm.xlu0 %215, %v166
        %v217 = vpop.permute.xlu0 %216
        %v219 = vsel %vm214, 1, 0
        %vm220 = vcmp.eq.s32.totalorder %v219, 1
        %v221 = vsel %vm220, %v217, %v213
        %vm222 = vcmp.ge.s32.totalorder %v173, 112
        %223 = vset.pattern.permute.xlu0 7
        %224 = vperm.xlu0 %223, %v166
        %v225 = vpop.permute.xlu0 %224
        %v227 = vsel %vm222, 1, 0
        %vm228 = vcmp.eq.s32.totalorder %v227, 1
        %v229 = vsel %vm228, %v225, %v221
        %v230 = vld [vmem:[%s1] sm:$0x1]
        %v231 = vld [vmem:[%s2] sm:$0x1]
        %v232 = vmul.f32 %v229, 0.62831855
        %v233 = vand.u32 2147483647, %v232
        %vm234 = vcmp.le.f32.partialorder %v233, 0.7853982
        %vm235 = vcmp.lt.s32.totalorder %v232, 0
        %v236 = vand.u32 %v232, 2139095040
        %v237 = vshrl.u32 %v236, 23
        %v238 = vsub.s32 %v237, 127
        %v239 = vand.u32 2147483647, %v232
        %v240 = vand.u32 %v239, 8388607
        %v241 = vor.u32 %v240, 8388608
        %v242 = vsub.s32 0, %v241
        %v243 = vadd.s32 %v238, 1
        %vm244 = vcmp.gt.s32.totalorder %v243, 0
        %v245 = vsel %vm244, %v243, 0
        %v246 = vshrl.u32 %v245, 5
        %v247 = vand.u32 %v245, 31
        %v248 = vsub.s32 32, %v247
        %v249 = vshrl.u32 683565275, %v248
        %v250 = vshll.u32 683565275, %v247
        %v251 = vshrl.u32 2475754826, %v248
        %v252 = vor.u32 %v250, %v251
        %v253 = vshll.u32 2475754826, %v247
        %v254 = vshrl.u32 2131351028, %v248
        %v255 = vor.u32 %v253, %v254
        %v256 = vshll.u32 2131351028, %v247
        %v257 = vshrl.u32 2102212464, %v248
        %v258 = vor.u32 %v256, %v257
        %v259 = vshll.u32 2102212464, %v247
        %v260 = vshrl.u32 920167782, %v248
        %v261 = vor.u32 %v259, %v260
        %v262 = vshll.u32 920167782, %v247
        %v263 = vshrl.u32 1326507024, %v248
        %v264 = vor.u32 %v262, %v263
        %vm265 = vcmp.lt.s32.totalorder %v246, 1
        %vm266 = vcmp.lt.s32.totalorder %v246, 2
        %vm267 = vcmp.lt.s32.totalorder %v246, 3
        %vm268 = vcmp.lt.s32.totalorder %v246, 4
        %v269 = vsel %vm265, %v249, %v252
        %v270 = vsel %vm268, %v258, 2102212464
        %v271 = vsel %vm267, %v255, %v270
        %v272 = vsel %vm266, %v269, %v271
        %v273 = vsel %vm265, %v252, %v255
        %v274 = vsel %vm268, %v261, 920167782
        %v275 = vsel %vm267, %v258, %v274
        %v276 = vsel %vm266, %v273, %v275
        %v277 = vsel %vm265, %v255, %v258
        %v278 = vsel %vm268, %v264, 1326507024
        %v279 = vsel %vm267, %v261, %v278
        %v280 = vsel %vm266, %v277, %v279
        %v281 = vshll.u32 %v241, 8
        %v282 = vmul.u32.u64.compose %v281, %v280
        %v283 = vextract.low.u32 %v282
        %v284 = vextract.high.u32 %v282
        %v285 = vmul.u32.u64.compose %v281, %v276
        %v286 = vextract.low.u32 %v285
        %v287 = vextract.high.u32 %v285
        %v288 = vmul.u32 %v281, %v272
        %v289 = vadd.s32 %v284, %v286
        %vm290 = vc.u32 %v284, %v286
        %v291 = vadd.s32 %v287, 1
        %v292 = vsel %vm290, %v291, %v287
        %v293 = vadd.s32 %v288, %v292
        %v294 = vadd.s32 %v293, 536870912
        %v295 = vshrl.u32 %v294, 30
        %v296 = vshll.u32 %v295, 30
        %v297 = vsub.s32 %v293, %v296
        %vm298 = vcmp.lt.s32.totalorder %v297, 0
        %v299 = vsub.s32 0, %v297
        %v300 = vsel %vm298, %v299, %v297
        %v301 = vclz %v300
        %v302 = vsub.s32 %v301, 2
        %vm303 = vcmp.gt.s32.totalorder 0, %v302
        %v304 = vsel %vm303, 0, %v302
        %v305 = vsub.s32 32, %v304
        %v306 = vshll.u32 %v297, %v304
        %v307 = vshrl.u32 %v289, %v305
        %v308 = vor.u32 %v306, %v307
        %v309 = vsub.s32 4294967266, %v304
        %v310 = vadd.s32 %v309, 127
        %v311 = vshll.u32 %v310, 23
        %v312 = vor.u32 4788187, %v311
        %v313 = vand.u32 2147483647, %v312
        %v315 = vcvt.s32.f32 %v308
        %v316 = vmul.f32 %v315, %v313
        %v317 = vxor.u32 %v316, 2147483648
        %v318 = vsel %vm235, %v317, %v316
        %v319 = vsub.s32 4, %v295
        %v320 = vsel %vm235, %v319, %v295
        %v321 = vsel %vm234, %v232, %v318
        %v322 = vsel %vm234, 0, %v320
        %v323 = vcosq.f32.pop %v321
        %v324 = vsinq.f32.pop %v321
        %vm325 = vweird.f32 %v232
        %v326 = vand.u32 %v322, 3
        %vm327 = vcmp.lt.s32.totalorder %v326, 2
        %vm328 = vcmp.eq.s32.totalorder %v326, 0
        %v329 = vxor.u32 %v324, 2147483648
        %v330 = vsel %vm328, %v323, %v329
        %vm331 = vcmp.eq.s32.totalorder %v326, 2
        %v332 = vxor.u32 %v323, 2147483648
        %v333 = vsel %vm331, %v332, %v324
        %v334 = vsel %vm327, %v330, %v333
        %v335 = vsel %vm325, nan, %v334
        %v336 = vadd.f32 %v335, 1.0
        %v337 = vmul.f32 %v336, 0.5
        %vm338 = vcmp.lt.f32.partialorder %v229, 5.0
        %v339 = vsel %vm338, 1, 0
        %v340 = vcvt.s32.f32 %v339
        %v341 = vmul.f32 %v337, %v340
        %v342 = vsub.f32 0.0, %v229
        %v343 = vmul.f32 %v342, 1.442695
        %v344 = vpow.pop %v343
        %v345 = vsub.f32 0.0, %v231
        %v347 = vlaneseq
        %v348 = vshrl.u32 %v347, 7
        %v349 = vsub.s32 0, %v348
        %v350 = vrot.slane %v230, %v349
        %v352 = vsub.f32 %v344, %v350
        %v353 = vmul.f32 %v352, %v352
        %v355 = vlaneseq
        %v356 = vshrl.u32 %v355, 7
        %v357 = vsub.s32 0, %v356
        %v358 = vrot.slane %v345, %v357
        %v360 = vmul.f32 %v358, %v353
        %v361 = vmul.f32 %v360, 1.442695
        %v362 = vpow.pop %v361
        %v363 = vmul.f32 %v341, %v362
        %364 = vst [vmem:[%s161] sm:$0xff] %v363
        %s365 = sand.u32 %s93, 1
        %s366 = scalar_lea.sflag [#allocation3], %s365
        %s367 = sand.u32 %s93, 1
        %s368 = smul.addr %s367, 8
        %s369 = scalar_lea.vmem [#allocation2], %s368
        // Predicated region
        $region33: #{tpu_custom_call.1} parent=31 // pred_check
          %p370 = pneg %p103
        $region34: #{tpu_custom_call.1} parent=31 // pred_check_branch
          %372 = sbr.rel (%p370) target = $region36
        $region35: #{tpu_custom_call.1} parent=31 // pred_region
          %s374 = ssub.s32 128, 128
          %375 = vsyncadd %s366, %s374
          %s376 = smul.addr %s17, 128
          %s377 = scalar_lea.hbm %s3, %s376
          %s379 = sshll.u32 %s369, 4
          %s380 = int_to_ptr.vmem [resolvable:$true] %s379
          %382 = dma.vmem_to_hbm [thread:$0]  %s380, 128, %s377, %s366
        $region36: #{tpu_custom_call.1} parent=31 // pred_fallthru
          _
      $region32: #{tpu_custom_call.1} parent=5 // pred_fallthru
        _
      %p383 = scmp.le.s32.totalorder 2, %s12
      // Predicated region
      $region37: #{tpu_custom_call.1} parent=5 // pred_check
        %p384 = pneg %p383
      $region38: #{tpu_custom_call.1} parent=5 // pred_check_branch
        %386 = sbr.rel (%p384) target = $region40
      $region39: #{tpu_custom_call.1} parent=5 // pred_region
        %s387 = ssub.s32 %s12, 2
        // Predicated region
        $region41: #{tpu_custom_call.1} parent=39 // pred_check
          %p388 = pneg %p109
        $region42: #{tpu_custom_call.1} parent=39 // pred_check_branch
          %390 = sbr.rel (%p388) target = $region44
        $region43: #{tpu_custom_call.1} parent=39 // pred_region
          %s391 = sand.u32 %s94, 1
          %s392 = scalar_lea.sflag [#allocation3], %s391
          %s393 = sand.u32 %s94, 1
          %s394 = smul.addr %s393, 8
          %s395 = scalar_lea.vmem [#allocation2], %s394
          %396 = dma.done %s392, 128
        $region44: #{tpu_custom_call.1} parent=39 // pred_fallthru
          _
      $region40: #{tpu_custom_call.1} parent=5 // pred_fallthru
        _
    $region6: #{tpu_custom_call.1} parent=1 // loop_footer
      %s16 = sadd.s32 1, %s12
    $region7: #{tpu_custom_call.1} parent=1 // loop_footer_branch
      %11 = sbr.rel target = $region3
    $region8: #{tpu_custom_call.1} parent=1 // loop_exit
      _
    %397 = vsyncpa [#allocation3], 1
    %s398 = scalar_lea.sflag [#allocation3], 1
    %399 = vsyncpa %s398, 1

</llo_original>
